<compile_context>
chip_gen: v6e
topology: v6e:2x2x1
jax: 0.10.0
libtpu: 0.0.40
codegen_flags: <defaults>
</compile_context>

<pallas_src>
import functools

import jax
import jax.numpy as jnp
import numpy as np
from jax.experimental import pallas as pl
from jax.experimental.pallas import tpu as pltpu


def _adain_kernel(c_ref, s_ref, o_ref, *, eps):
    # c_ref/s_ref/o_ref: (rows_block, H*W)  -- one row per (batch, channel).
    n = c_ref.shape[-1]

    c = c_ref[...].astype(jnp.float32)
    s = s_ref[...].astype(jnp.float32)

    inv_n = jnp.float32(1.0 / n)
    inv_nm1 = jnp.float32(1.0 / (n - 1))  # unbiased std, matches torch .std()

    c_mean = jnp.sum(c, axis=-1, keepdims=True) * inv_n
    s_mean = jnp.sum(s, axis=-1, keepdims=True) * inv_n

    c_ctr = c - c_mean
    s_ctr = s - s_mean

    c_var = jnp.sum(c_ctr * c_ctr, axis=-1, keepdims=True) * inv_nm1
    s_var = jnp.sum(s_ctr * s_ctr, axis=-1, keepdims=True) * inv_nm1

    c_std = jnp.sqrt(c_var) + jnp.float32(eps)
    s_std = jnp.sqrt(s_var) + jnp.float32(eps)

    # style_std * (content - content_mean) / content_std + style_mean
    scale = s_std / c_std                      # (rows, 1) -- tiny per-row work
    o_ref[...] = (c_ctr * scale + s_mean).astype(o_ref.dtype)


@functools.partial(jax.jit, static_argnames=("eps",))
def adain_forward(content, style, *, eps=1e-8):
    """AdaIN forward. content/style: (B, C, H, W)  ->  (B, C, H, W)."""
    B, C, H, W = content.shape
    rows = B * C
    npix = H * W

    # Free views: NCHW is contiguous per (b, c) plane.
    c2 = content.reshape(rows, npix)
    s2 = style.reshape(rows, npix)

    # Row tiling: one block for small problems; tile (and parallelize across
    # TensorCores) when rows is large.  Lane dim is always the full H*W.
    if rows % 8 == 0:
        row_block = min(rows, 1024)
    else:
        row_block = rows  # full-extent block is always legal
    grid = (pl.cdiv(rows, row_block),)

    out2 = pl.pallas_call(
        functools.partial(_adain_kernel, eps=eps),
        out_shape=jax.ShapeDtypeStruct((rows, npix), content.dtype),
        grid=grid,
        in_specs=[
            pl.BlockSpec((row_block, npix), lambda i: (i, 0)),
            pl.BlockSpec((row_block, npix), lambda i: (i, 0)),
        ],
        out_specs=pl.BlockSpec((row_block, npix), lambda i: (i, 0)),
        compiler_params=pltpu.CompilerParams(
            dimension_semantics=("parallel",)),
    )(c2, s2)

    return out2.reshape(B, C, H, W)


def _reference_adain(content, style, eps):
    """Pure-JAX reference matching the PyTorch module exactly."""
    B, C = content.shape[:2]

    def mean_std(x):
        xf = x.reshape(B, C, -1)
        m = xf.mean(axis=2).reshape(B, C, 1, 1)
        s = xf.std(axis=2, ddof=1).reshape(B, C, 1, 1) + eps  # torch .std() is unbiased
        return m, s

    cm, cs = mean_std(content)
    sm, ss = mean_std(style)
    return ss * (content - cm) / cs + sm


if __name__ == "__main__":
    # Small shapes consistent with the module: batch=2, channels=4, spatial=16.
    B, Cc, H, W = 2, 4, 16, 16
    EPS = 1e-8

    key = jax.random.PRNGKey(0)
    kc, ks = jax.random.split(key, 2)
    content = jax.random.normal(kc, (B, Cc, H, W), jnp.float32)
    style = 2.5 * jax.random.normal(ks, (B, Cc, H, W), jnp.float32) + 0.7

    out = adain_forward(content, style, eps=EPS)
    jax.block_until_ready(out)

    ref = _reference_adain(content, style, EPS)
    np.testing.assert_allclose(np.asarray(out), np.asarray(ref),
                               rtol=1e-5, atol=1e-5)

    print("KERNEL_OK")
</pallas_src>

<mosaic_0001>
module attributes {stable_mosaic.version = 11 : i64} {
  func.func @_adain_kernel(%arg0: i32, %arg1: memref<8x256xf32, #tpu.memory_space<vmem>>, %arg2: memref<8x256xf32, #tpu.memory_space<vmem>>, %arg3: memref<8x256xf32, #tpu.memory_space<vmem>>) attributes {dimension_semantics = [#tpu.dimension_semantics<parallel>], iteration_bounds = array<i64: 1>, scalar_prefetch = 0 : i64, scratch_operands = 0 : i64, tpu.core_type = #tpu.core_type<tc>, window_params = [{transform_indices = @transform_0, window_bounds = array<i64: 8, 256>}, {transform_indices = @transform_1, window_bounds = array<i64: 8, 256>}, {transform_indices = @transform_2, window_bounds = array<i64: 8, 256>}]} {
    %c0 = arith.constant 0 : index
    %c0_0 = arith.constant 0 : index
    %0 = vector.load %arg1[%c0, %c0_0] : memref<8x256xf32, #tpu.memory_space<vmem>>, vector<8x256xf32>
    %c0_1 = arith.constant 0 : index
    %c0_2 = arith.constant 0 : index
    %1 = vector.load %arg2[%c0_1, %c0_2] : memref<8x256xf32, #tpu.memory_space<vmem>>, vector<8x256xf32>
    %cst = arith.constant dense<0.000000e+00> : vector<8xf32>
    %2 = vector.multi_reduction <add>, %0, %cst [1] : vector<8x256xf32> to vector<8xf32>
    %3 = vector.shape_cast %2 : vector<8xf32> to vector<8x1xf32>
    %cst_3 = arith.constant 3.906250e-03 : f32
    %4 = vector.broadcast %cst_3 : f32 to vector<8x1xf32>
    %5 = arith.mulf %3, %4 : vector<8x1xf32>
    %cst_4 = arith.constant dense<0.000000e+00> : vector<8xf32>
    %6 = vector.multi_reduction <add>, %1, %cst_4 [1] : vector<8x256xf32> to vector<8xf32>
    %7 = vector.shape_cast %6 : vector<8xf32> to vector<8x1xf32>
    %cst_5 = arith.constant 3.906250e-03 : f32
    %8 = vector.broadcast %cst_5 : f32 to vector<8x1xf32>
    %9 = arith.mulf %7, %8 : vector<8x1xf32>
    %10 = vector.broadcast %5 : vector<8x1xf32> to vector<8x256xf32>
    %11 = arith.subf %0, %10 : vector<8x256xf32>
    %12 = vector.broadcast %9 : vector<8x1xf32> to vector<8x256xf32>
    %13 = arith.subf %1, %12 : vector<8x256xf32>
    %14 = arith.mulf %11, %11 : vector<8x256xf32>
    %cst_6 = arith.constant dense<0.000000e+00> : vector<8xf32>
    %15 = vector.multi_reduction <add>, %14, %cst_6 [1] : vector<8x256xf32> to vector<8xf32>
    %16 = vector.shape_cast %15 : vector<8xf32> to vector<8x1xf32>
    %cst_7 = arith.constant 0.00392156886 : f32
    %17 = vector.broadcast %cst_7 : f32 to vector<8x1xf32>
    %18 = arith.mulf %16, %17 : vector<8x1xf32>
    %19 = arith.mulf %13, %13 : vector<8x256xf32>
    %cst_8 = arith.constant dense<0.000000e+00> : vector<8xf32>
    %20 = vector.multi_reduction <add>, %19, %cst_8 [1] : vector<8x256xf32> to vector<8xf32>
    %21 = vector.shape_cast %20 : vector<8xf32> to vector<8x1xf32>
    %cst_9 = arith.constant 0.00392156886 : f32
    %22 = vector.broadcast %cst_9 : f32 to vector<8x1xf32>
    %23 = arith.mulf %21, %22 : vector<8x1xf32>
    %24 = math.sqrt %18 : vector<8x1xf32>
    %cst_10 = arith.constant 9.99999993E-9 : f32
    %25 = vector.broadcast %cst_10 : f32 to vector<8x1xf32>
    %26 = arith.addf %24, %25 : vector<8x1xf32>
    %27 = math.sqrt %23 : vector<8x1xf32>
    %cst_11 = arith.constant 9.99999993E-9 : f32
    %28 = vector.broadcast %cst_11 : f32 to vector<8x1xf32>
    %29 = arith.addf %27, %28 : vector<8x1xf32>
    %30 = arith.divf %29, %26 : vector<8x1xf32>
    %31 = vector.broadcast %30 : vector<8x1xf32> to vector<8x256xf32>
    %32 = arith.mulf %11, %31 : vector<8x256xf32>
    %33 = vector.broadcast %9 : vector<8x1xf32> to vector<8x256xf32>
    %34 = arith.addf %32, %33 : vector<8x256xf32>
    %c0_12 = arith.constant 0 : index
    %c0_13 = arith.constant 0 : index
    %35 = vector.load %arg3[%c0_12, %c0_13] : memref<8x256xf32, #tpu.memory_space<vmem>>, vector<8x256xf32>
    tpu.vector_store %arg3[%c0_12, %c0_13], %34 {strides = array<i32>} : memref<8x256xf32, #tpu.memory_space<vmem>>, vector<8x256xf32>,
    return
  }
  func.func @transform_0(%arg0: i32) -> (i32, i32) {
    %c0_i32 = arith.constant 0 : i32
    %c0_i32_0 = arith.constant 0 : i32
    return %arg0, %c0_i32 : i32, i32
  }
  func.func @transform_1(%arg0: i32) -> (i32, i32) {
    %c0_i32 = arith.constant 0 : i32
    %c0_i32_0 = arith.constant 0 : i32
    return %arg0, %c0_i32 : i32, i32
  }
  func.func @transform_2(%arg0: i32) -> (i32, i32) {
    %c0_i32 = arith.constant 0 : i32
    %c0_i32_0 = arith.constant 0 : i32
    return %arg0, %c0_i32 : i32, i32
  }
}

</mosaic_0001>

<llo_original>
// kernel: adain_forward.1
$region0: #{adain_forward.1}
  #allocation0 [shape = 'u32[]', space=smem, size = 0x4, offset = 0x4, fixed_abs, tag = 'smem constant byte address 0x4 - core index']
  #allocation1 [shape = 'u32[144,128]{1,0:T(1,128)}', space=vmem, size = 0x12000, scoped, tag = 'internal scratch']
  %s0 = inlined_call_operand.vmem [shape: f32[8,256], index: 0, kind: input, shape index: {}]
  %s1 = inlined_call_operand.vmem [shape: f32[8,256], index: 1, kind: input, shape index: {}]
  %s2 = inlined_call_operand.vmem [shape: f32[8,256], index: 2, kind: output, shape index: {}]
  %s3 = sld [smem:[#allocation0]]
  $region18: #{adain_forward.1} parent=0
    _
  %s5 = ssub.s32 1, %s3
  %s6 = scalar_select 0, %s5, %s3
  // Predicated region
  $region2: #{adain_forward.1} parent=0 // pred_check
    _
  $region3: #{adain_forward.1} parent=0 // pred_check_branch
    %8 = sbr.rel (0) target = $region5
  $region4: #{adain_forward.1} parent=0 // pred_region
    _
  $region5: #{adain_forward.1} parent=0 // pred_fallthru
    _
  // Predicated region
  $region6: #{adain_forward.1} parent=0 // pred_check
    _
  $region7: #{adain_forward.1} parent=0 // pred_check_branch
    %10 = sbr.rel (0) target = $region9
  $region8: #{adain_forward.1} parent=0 // pred_region
    _
  $region9: #{adain_forward.1} parent=0 // pred_fallthru
    _
  %v11 = vld [vmem:[%s0] sm:$0xff]
  %v12 = vld [vmem:[%s0 + $0x8] sm:$0xff]
  %v13 = vld [vmem:[%s1] sm:$0xff]
  %v14 = vld [vmem:[%s1 + $0x8] sm:$0xff]
  %v15 = vadd.f32 %v11, %v12
  %16 = vadd.xlane.f32.xlu0 %v15
  %v17 = vpop.xlane.xlu0 %16
  %v18 = vmul.f32 %v17, 0.00390625
  %v19 = vadd.f32 %v13, %v14
  %20 = vadd.xlane.f32.xlu0 %v19
  %v21 = vpop.xlane.xlu0 %20
  %v22 = vmul.f32 %v21, 0.00390625
  %v23 = vsub.f32 %v11, %v18
  %v24 = vsub.f32 %v12, %v18
  %v25 = vsub.f32 %v13, %v22
  %v26 = vsub.f32 %v14, %v22
  %v27 = vmul.f32 %v23, %v23
  %v28 = vmul.f32 %v24, %v24
  %v29 = vadd.f32 %v27, %v28
  %30 = vadd.xlane.f32.xlu0 %v29
  %v31 = vpop.xlane.xlu0 %30
  %v32 = vmul.f32 %v31, 0.003921569
  %v33 = vmul.f32 %v25, %v25
  %v34 = vmul.f32 %v26, %v26
  %v35 = vadd.f32 %v33, %v34
  %36 = vadd.xlane.f32.xlu0 %v35
  %v37 = vpop.xlane.xlu0 %36
  %v38 = vmul.f32 %v37, 0.003921569
  %v39 = vrsqrt.pop %v32
  %v40 = vmul.f32 %v32, %v39
  %vm41 = vcmp.eq.f32.partialorder %v32, inf
  %v42 = vsel %vm41, %v32, %v40
  %vm43 = vcmp.eq.f32.partialorder %v32, 0.0
  %v44 = vand.u32 %v32, 2147483648
  %v45 = vsel %vm43, %v44, %v42
  %v46 = vadd.f32 %v45, 1e-08
  %v47 = vrsqrt.pop %v38
  %v48 = vmul.f32 %v38, %v47
  %vm49 = vcmp.eq.f32.partialorder %v38, inf
  %v50 = vsel %vm49, %v38, %v48
  %vm51 = vcmp.eq.f32.partialorder %v38, 0.0
  %v52 = vand.u32 %v38, 2147483648
  %v53 = vsel %vm51, %v52, %v50
  %v54 = vadd.f32 %v53, 1e-08
  %v55 = vrcp.pop %v46
  %v56 = vmul.f32 %v54, %v55
  %v57 = vmul.f32 %v23, %v56
  %v58 = vmul.f32 %v24, %v56
  %v59 = vadd.f32 %v57, %v22
  %v60 = vadd.f32 %v58, %v22
  %61 = vst [vmem:[%s2] sm:$0xff] %v59
  %62 = vst [vmem:[%s2 + $0x8] sm:$0xff] %v60
  // Predicated region
  $region10: #{adain_forward.1} parent=0 // pred_check
    _
  $region11: #{adain_forward.1} parent=0 // pred_check_branch
    %64 = sbr.rel (0) target = $region13
  $region12: #{adain_forward.1} parent=0 // pred_region
    _
  $region13: #{adain_forward.1} parent=0 // pred_fallthru
    _
  // Predicated region
  $region14: #{adain_forward.1} parent=0 // pred_check
    _
  $region15: #{adain_forward.1} parent=0 // pred_check_branch
    %66 = sbr.rel (0) target = $region17
  $region16: #{adain_forward.1} parent=0 // pred_region
    _
  $region17: #{adain_forward.1} parent=0 // pred_fallthru
    _

</llo_original>
